<compile_context>
chip_gen: v5e
topology: v5e:2x2
jax: 0.10.0
libtpu: 0.0.40
codegen_flags: <defaults>
</compile_context>

<pallas_src>
import math
import functools

import jax
import jax.numpy as jnp
from jax.experimental import pallas as pl
from jax.experimental.pallas import tpu as pltpu


# ----------------------------------------------------------------------------
# Parameter construction (deterministic, mirrors FixedEmbedding.__init__)
# ----------------------------------------------------------------------------
def fixed_embedding_table(c_in: int, d_model: int) -> jnp.ndarray:
    """Sinusoidal table identical to FixedEmbedding's weight (c_in, d_model)."""
    assert d_model % 2 == 0, "d_model must be even (sin/cos interleave)"
    position = jnp.arange(c_in, dtype=jnp.float32)[:, None]                 # (c_in, 1)
    div_term = jnp.exp(
        jnp.arange(0, d_model, 2, dtype=jnp.float32) * -(math.log(10000.0) / d_model)
    )                                                                        # (d_model/2,)
    w = jnp.zeros((c_in, d_model), dtype=jnp.float32)
    w = w.at[:, 0::2].set(jnp.sin(position * div_term))
    w = w.at[:, 1::2].set(jnp.cos(position * div_term))
    return w


# Vocab size per time feature, keyed by x's last-axis column index.
_FEATURE_SIZES = {
    0: 13,  # month
    1: 32,  # day
    2: 7,   # weekday
    3: 24,  # hour
    4: 4,   # minute (only used when freq == 't')
}


def build_combined_table(d_model: int, freq: str = "h"):
    """Concatenate per-feature tables along vocab axis, pad vocab to a 128-lane multiple.

    Returns (table_pad: (V_pad, d_model) f32, offsets: static tuple, total_vocab: int).
    """
    n_feats = 5 if freq == "t" else 4
    sizes = [_FEATURE_SIZES[f] for f in range(n_feats)]
    offs, acc = [], 0
    for s in sizes:
        offs.append(acc)
        acc += s
    combined = jnp.concatenate(
        [fixed_embedding_table(s, d_model) for s in sizes], axis=0)          # (V, d_model)
    v_pad = ((acc + 127) // 128) * 128
    table_pad = jnp.zeros((v_pad, d_model), jnp.float32).at[:acc, :].set(combined)
    return table_pad, tuple(offs), acc


# ----------------------------------------------------------------------------
# Pallas kernel: packed multi-hot (VMEM scratch) @ block-diagonal bf16 hi/lo tables
# ----------------------------------------------------------------------------
def _temporal_embed_kernel(idx_ref, thi_ref, tlo_ref, out_ref, mh_ref, *,
                           n_feats, f_in, groups, v_pad, offs, total):
    # idx_ref:  (TR, groups*f_in) int32 RAW time-feature indices; `groups` original rows
    #           packed per kernel row (group g occupies columns g*f_in .. g*f_in+f_in-1,
    #           only the first n_feats of each group are used).
    # thi_ref / tlo_ref: (groups*v_pad, groups*d_model) bf16 block-diagonal tables
    #           (hi + lo ≈ f32 table), constant index_map → VMEM-resident across the grid.
    # out_ref:  (TR, groups*d_model) f32 — lane-dense (128 lanes when d_model=32, G=4).
    # mh_ref:   (TR, groups*v_pad) bf16 VMEM scratch for the multi-hot.
    idx = idx_ref[...]
    tr = idx.shape[0]

    # --- Static lane-ownership map over the combined vocab (computed once per step on
    # (1, v_pad) vregs — negligible).  lane_local[v] = v - offset(feature owning lane v);
    # padding lanes get -1 so they never match a raw index (>= 0).
    lane = jax.lax.broadcasted_iota(jnp.int32, (1, v_pad), 1)
    off_of_lane = jnp.zeros((1, v_pad), jnp.int32)
    feat_masks = []
    for f in range(1, n_feats):
        m = lane >= offs[f]
        feat_masks.append(m)
        off_of_lane = jnp.where(m, offs[f], off_of_lane)
    lane_local = jnp.where(lane < total, lane - off_of_lane, -1)

    # --- Per-group multi-hot via lane-ownership select: pick the owning feature's raw
    # index per lane (n_feats-1 selects), one compare, one cast — written straight into
    # the 128-lane-aligned slice of the VMEM scratch (no concatenate, no extra copy).
    for g in range(groups):
        base = g * f_in
        gathered = idx[:, base:base + 1]                       # feature 0 (broadcasts)
        for f in range(1, n_feats):
            gathered = jnp.where(feat_masks[f - 1], idx[:, base + f:base + f + 1],
                                 gathered)                     # (tr, v_pad)
        mh_ref[:, g * v_pad:(g + 1) * v_pad] = (
            (gathered == lane_local).astype(jnp.bfloat16))

    # --- Sum-of-embeddings for every packed row == multi_hot @ block-diagonal table.
    # Two native-rate bf16 matmuls (hi + lo) accumulated in f32 ≈ f32 accuracy.
    mh = mh_ref[...]
    acc = jnp.dot(mh, thi_ref[...], preferred_element_type=jnp.float32)
    acc = acc + jnp.dot(mh, tlo_ref[...], preferred_element_type=jnp.float32)
    out_ref[...] = acc


# ----------------------------------------------------------------------------
# Wrapper
# ----------------------------------------------------------------------------
@functools.partial(jax.jit, static_argnames=("d_model", "freq", "row_tile"))
def temporal_embedding(x, d_model: int = 32, freq: str = "h", row_tile: int = 8192):
    """Pallas implementation of TemporalEmbedding.forward.

    x: (B, L, F_in) integer (or float) array, F_in >= 4 (column 4 used only when freq='t').
    Returns (B, L, d_model) float32.
    """
    if d_model % 2 != 0:
        raise ValueError("d_model must be even")
    b, l, f_in = x.shape
    n_feats = 5 if freq == "t" else 4
    if f_in < n_feats:
        raise ValueError(f"x needs at least {n_feats} time-feature columns, got {f_in}")
    n = b * l

    table, offs, total = build_combined_table(d_model, freq)    # (V_pad, d_model)
    v_pad = table.shape[0]

    # Lane-dense packing factor: pack G original rows per kernel row so the output last
    # dim is 128 lanes wide (full-width, unmasked vector stores).
    groups = 128 // d_model if (d_model < 128 and 128 % d_model == 0) else 1
    d_out = groups * d_model

    # hi/lo bf16 split: table ≈ hi + lo to ~4e-6/element, MXU runs at native bf16 rate.
    t_hi = table.astype(jnp.bfloat16)
    t_lo = (table - t_hi.astype(jnp.float32)).astype(jnp.bfloat16)

    def block_diag(t):
        if groups == 1:
            return t
        out = jnp.zeros((groups * v_pad, d_out), t.dtype)
        for g in range(groups):
            out = out.at[g * v_pad:(g + 1) * v_pad,
                         g * d_model:(g + 1) * d_model].set(t)
        return out

    thi_k = block_diag(t_hi)                                    # (G*V_pad, G*d_model)
    tlo_k = block_diag(t_lo)

    # Raw indices (per-feature vocab offsets are folded into the kernel's lane map, so no
    # full-tensor "+offsets" rewrite here).  Mirrors PyTorch's x.long().
    idx = x.astype(jnp.int32).reshape(n, f_in)

    # Packed-row geometry: 1 kernel row = `groups` original rows.
    n_g = pl.cdiv(n, groups)
    tile = max(8, (row_tile // groups // 8) * 8)                # multiple of 8 sublanes
    if n_g <= tile:
        if n_g >= 16:
            # Keep grid0 >= 2 so v7x's second TensorCore gets work from the parallel axis.
            tile = ((n_g + 1) // 2 + 7) // 8 * 8
        else:
            tile = n_g                                          # single full block (legal)
    grid0 = pl.cdiv(n_g, tile)

    # Pad the cheap int32 index input so every *input* block is fully in bounds; the
    # *output* keeps the exact packed row count — Pallas masks writes of a ragged final
    # block, so no post-kernel slice copy of the output in the divisible case.
    n_rows_in = grid0 * tile * groups
    if n_rows_in != n:
        idx = jnp.concatenate(
            [idx, jnp.zeros((n_rows_in - n, f_in), jnp.int32)], axis=0)
    packed_idx = idx.reshape(grid0 * tile, groups * f_in)

    kernel = functools.partial(
        _temporal_embed_kernel, n_feats=n_feats, f_in=f_in,
        groups=groups, v_pad=v_pad, offs=offs, total=total)

    out_packed = pl.pallas_call(
        kernel,
        out_shape=jax.ShapeDtypeStruct((n_g, d_out), jnp.float32),
        grid_spec=pltpu.PrefetchScalarGridSpec(
            num_scalar_prefetch=0,
            grid=(grid0,),
            in_specs=[
                pl.BlockSpec((tile, groups * f_in), lambda i: (i, 0)),    # raw index tile
                pl.BlockSpec((groups * v_pad, d_out), lambda i: (0, 0)),  # hi table (resident)
                pl.BlockSpec((groups * v_pad, d_out), lambda i: (0, 0)),  # lo table (resident)
            ],
            out_specs=pl.BlockSpec((tile, d_out), lambda i: (i, 0)),
            scratch_shapes=[pltpu.VMEM((tile, groups * v_pad), jnp.bfloat16)],
        ),
        compiler_params=pltpu.CompilerParams(
            dimension_semantics=("parallel",),    # row axis shards across v7x's 2 TCs
            vmem_limit_bytes=48 << 20,            # headroom above v5e's 16 MiB default
        ),
    )(packed_idx, thi_k, tlo_k)

    if n_g * groups == n:
        # (N/G, G*d_model) row-major is the same layout as (N, d_model): free reshape.
        return out_packed.reshape(b, l, d_model)
    # Rare ragged case (B*L not a multiple of G): drop padded tail groups of the last row.
    return out_packed.reshape(-1, d_model)[:n].reshape(b, l, d_model)


# ----------------------------------------------------------------------------
# Pure-JAX reference (mirrors the PyTorch forward exactly, in f32)
# ----------------------------------------------------------------------------
def temporal_embedding_ref(x, d_model: int = 32, freq: str = "h"):
    x = x.astype(jnp.int32)
    month_t = fixed_embedding_table(_FEATURE_SIZES[0], d_model)
    day_t = fixed_embedding_table(_FEATURE_SIZES[1], d_model)
    wday_t = fixed_embedding_table(_FEATURE_SIZES[2], d_model)
    hour_t = fixed_embedding_table(_FEATURE_SIZES[3], d_model)
    out = (hour_t[x[:, :, 3]] + wday_t[x[:, :, 2]]
           + day_t[x[:, :, 1]] + month_t[x[:, :, 0]])
    if freq == "t":
        minute_t = fixed_embedding_table(_FEATURE_SIZES[4], d_model)
        out = out + minute_t[x[:, :, 4]]
    return out


if __name__ == "__main__":
    key = jax.random.PRNGKey(0)
    B, L, D_MODEL = 2, 8, 32
    FREQ = "h"  # default TemporalEmbedding freq (no minute embedding)

    # Integer time features: month, day, weekday, hour, minute.
    ks = jax.random.split(key, 5)
    x = jnp.stack([
        jax.random.randint(ks[0], (B, L), 0, 13),
        jax.random.randint(ks[1], (B, L), 0, 32),
        jax.random.randint(ks[2], (B, L), 0, 7),
        jax.random.randint(ks[3], (B, L), 0, 24),
        jax.random.randint(ks[4], (B, L), 0, 4)], axis=-1)          # (B, L, 5) int32

    # NOTE: tolerance deliberately 1e-4 — the bf16 hi/lo MXU split bounds the error at
    # ~4e-6 per table element (< 2e-5 after summing 4-5 embeddings).
    out = jax.block_until_ready(temporal_embedding(x, d_model=D_MODEL, freq=FREQ))
    ref = temporal_embedding_ref(x, d_model=D_MODEL, freq=FREQ)
    assert out.shape == (B, L, D_MODEL), out.shape
    assert jnp.allclose(out, ref, atol=1e-4, rtol=1e-5), float(jnp.max(jnp.abs(out - ref)))

    # Second check: exercises the multi-step grid path (grid0 >= 2 via the v7x guard),
    # resident tables, lane-dense 128-wide output, exactly divisible (no padding/slice).
    B2, L2 = 2, 2048
    ks2 = jax.random.split(jax.random.PRNGKey(1), 5)
    x2 = jnp.stack([
        jax.random.randint(ks2[0], (B2, L2), 0, 13),
        jax.random.randint(ks2[1], (B2, L2), 0, 32),
        jax.random.randint(ks2[2], (B2, L2), 0, 7),
        jax.random.randint(ks2[3], (B2, L2), 0, 24),
        jax.random.randint(ks2[4], (B2, L2), 0, 4)], axis=-1)
    out2 = jax.block_until_ready(temporal_embedding(x2, d_model=D_MODEL, freq=FREQ))
    ref2 = temporal_embedding_ref(x2, d_model=D_MODEL, freq=FREQ)
    assert out2.shape == (B2, L2, D_MODEL), out2.shape
    assert jnp.allclose(out2, ref2, atol=1e-4, rtol=1e-5), float(jnp.max(jnp.abs(out2 - ref2)))

    print("KERNEL_OK")
</pallas_src>

<mosaic_0001>
module attributes {stable_mosaic.version = 11 : i64} {
  func.func @_temporal_embed_kernel(%arg0: i32, %arg1: memref<4x20xi32, #tpu.memory_space<vmem>>, %arg2: memref<512x128xbf16, #tpu.memory_space<vmem>>, %arg3: memref<512x128xbf16, #tpu.memory_space<vmem>>, %arg4: memref<4x128xf32, #tpu.memory_space<vmem>>, %arg5: memref<4x512xbf16, #tpu.memory_space<vmem>>) attributes {dimension_semantics = [#tpu.dimension_semantics<parallel>], iteration_bounds = array<i64: 1>, scalar_prefetch = 0 : i64, scratch_operands = 1 : i64, tpu.core_type = #tpu.core_type<tc>, window_params = [{transform_indices = @transform_0, window_bounds = array<i64: 4, 20>}, {pipeline_mode = #tpu.pipeline_mode<synchronous>, transform_indices = @transform_1, window_bounds = array<i64: 512, 128>}, {pipeline_mode = #tpu.pipeline_mode<synchronous>, transform_indices = @transform_2, window_bounds = array<i64: 512, 128>}, {transform_indices = @transform_3, window_bounds = array<i64: 4, 128>}]} {
    %c0 = arith.constant 0 : index
    %c0_0 = arith.constant 0 : index
    %0 = vector.load %arg1[%c0, %c0_0] : memref<4x20xi32, #tpu.memory_space<vmem>>, vector<4x20xi32>
    %1 = tpu.iota {dimensions = array<i32: 1>} : vector<1x128xi32>
    %c0_i32 = arith.constant 0 : i32
    %2 = vector.broadcast %c0_i32 : i32 to vector<1x128xi32>
    %c13_i32 = arith.constant 13 : i32
    %3 = vector.broadcast %c13_i32 : i32 to vector<1x128xi32>
    %4 = arith.cmpi sge, %1, %3 : vector<1x128xi32>
    %c13_i32_1 = arith.constant 13 : i32
    %5 = vector.broadcast %c13_i32_1 : i32 to vector<1x128xi32>
    %6 = arith.select %4, %5, %2 : vector<1x128xi1>, vector<1x128xi32>
    %c45_i32 = arith.constant 45 : i32
    %7 = vector.broadcast %c45_i32 : i32 to vector<1x128xi32>
    %8 = arith.cmpi sge, %1, %7 : vector<1x128xi32>
    %c45_i32_2 = arith.constant 45 : i32
    %9 = vector.broadcast %c45_i32_2 : i32 to vector<1x128xi32>
    %10 = arith.select %8, %9, %6 : vector<1x128xi1>, vector<1x128xi32>
    %c52_i32 = arith.constant 52 : i32
    %11 = vector.broadcast %c52_i32 : i32 to vector<1x128xi32>
    %12 = arith.cmpi sge, %1, %11 : vector<1x128xi32>
    %c52_i32_3 = arith.constant 52 : i32
    %13 = vector.broadcast %c52_i32_3 : i32 to vector<1x128xi32>
    %14 = arith.select %12, %13, %10 : vector<1x128xi1>, vector<1x128xi32>
    %c76_i32 = arith.constant 76 : i32
    %15 = vector.broadcast %c76_i32 : i32 to vector<1x128xi32>
    %16 = arith.cmpi slt, %1, %15 : vector<1x128xi32>
    %17 = arith.subi %1, %14 : vector<1x128xi32>
    %c-1_i32 = arith.constant -1 : i32
    %18 = vector.broadcast %c-1_i32 : i32 to vector<1x128xi32>
    %19 = arith.select %16, %17, %18 : vector<1x128xi1>, vector<1x128xi32>
    %20 = vector.extract_strided_slice %0 {offsets = [0, 0], sizes = [4, 1], strides = [1, 1]} : vector<4x20xi32> to vector<4x1xi32>
    %21 = vector.extract_strided_slice %0 {offsets = [0, 1], sizes = [4, 1], strides = [1, 1]} : vector<4x20xi32> to vector<4x1xi32>
    %22 = vector.shape_cast %4 : vector<1x128xi1> to vector<1x128xi1>
    %23 = vector.broadcast %22 : vector<1x128xi1> to vector<4x128xi1>
    %24 = vector.shape_cast %21 : vector<4x1xi32> to vector<4x1xi32>
    %25 = vector.broadcast %24 : vector<4x1xi32> to vector<4x128xi32>
    %26 = vector.shape_cast %20 : vector<4x1xi32> to vector<4x1xi32>
    %27 = vector.broadcast %26 : vector<4x1xi32> to vector<4x128xi32>
    %28 = arith.select %23, %25, %27 : vector<4x128xi1>, vector<4x128xi32>
    %29 = vector.extract_strided_slice %0 {offsets = [0, 2], sizes = [4, 1], strides = [1, 1]} : vector<4x20xi32> to vector<4x1xi32>
    %30 = vector.shape_cast %8 : vector<1x128xi1> to vector<1x128xi1>
    %31 = vector.broadcast %30 : vector<1x128xi1> to vector<4x128xi1>
    %32 = vector.shape_cast %29 : vector<4x1xi32> to vector<4x1xi32>
    %33 = vector.broadcast %32 : vector<4x1xi32> to vector<4x128xi32>
    %34 = arith.select %31, %33, %28 : vector<4x128xi1>, vector<4x128xi32>
    %35 = vector.extract_strided_slice %0 {offsets = [0, 3], sizes = [4, 1], strides = [1, 1]} : vector<4x20xi32> to vector<4x1xi32>
    %36 = vector.shape_cast %12 : vector<1x128xi1> to vector<1x128xi1>
    %37 = vector.broadcast %36 : vector<1x128xi1> to vector<4x128xi1>
    %38 = vector.shape_cast %35 : vector<4x1xi32> to vector<4x1xi32>
    %39 = vector.broadcast %38 : vector<4x1xi32> to vector<4x128xi32>
    %40 = arith.select %37, %39, %34 : vector<4x128xi1>, vector<4x128xi32>
    %41 = vector.broadcast %19 : vector<1x128xi32> to vector<4x128xi32>
    %42 = arith.cmpi eq, %40, %41 : vector<4x128xi32>
    %43 = arith.extui %42 : vector<4x128xi1> to vector<4x128xi32>
    %44 = arith.sitofp %43 : vector<4x128xi32> to vector<4x128xf32>
    %45 = arith.truncf %44 : vector<4x128xf32> to vector<4x128xbf16>
    %c0_4 = arith.constant 0 : index
    %c0_5 = arith.constant 0 : index
    %46 = vector.load %arg5[%c0_4, %c0_5] : memref<4x512xbf16, #tpu.memory_space<vmem>>, vector<4x128xbf16>
    tpu.vector_store %arg5[%c0_4, %c0_5], %45 {strides = array<i32>} : memref<4x512xbf16, #tpu.memory_space<vmem>>, vector<4x128xbf16>,
    %47 = vector.extract_strided_slice %0 {offsets = [0, 5], sizes = [4, 1], strides = [1, 1]} : vector<4x20xi32> to vector<4x1xi32>
    %48 = vector.extract_strided_slice %0 {offsets = [0, 6], sizes = [4, 1], strides = [1, 1]} : vector<4x20xi32> to vector<4x1xi32>
    %49 = vector.shape_cast %4 : vector<1x128xi1> to vector<1x128xi1>
    %50 = vector.broadcast %49 : vector<1x128xi1> to vector<4x128xi1>
    %51 = vector.shape_cast %48 : vector<4x1xi32> to vector<4x1xi32>
    %52 = vector.broadcast %51 : vector<4x1xi32> to vector<4x128xi32>
    %53 = vector.shape_cast %47 : vector<4x1xi32> to vector<4x1xi32>
    %54 = vector.broadcast %53 : vector<4x1xi32> to vector<4x128xi32>
    %55 = arith.select %50, %52, %54 : vector<4x128xi1>, vector<4x128xi32>
    %56 = vector.extract_strided_slice %0 {offsets = [0, 7], sizes = [4, 1], strides = [1, 1]} : vector<4x20xi32> to vector<4x1xi32>
    %57 = vector.shape_cast %8 : vector<1x128xi1> to vector<1x128xi1>
    %58 = vector.broadcast %57 : vector<1x128xi1> to vector<4x128xi1>
    %59 = vector.shape_cast %56 : vector<4x1xi32> to vector<4x1xi32>
    %60 = vector.broadcast %59 : vector<4x1xi32> to vector<4x128xi32>
    %61 = arith.select %58, %60, %55 : vector<4x128xi1>, vector<4x128xi32>
    %62 = vector.extract_strided_slice %0 {offsets = [0, 8], sizes = [4, 1], strides = [1, 1]} : vector<4x20xi32> to vector<4x1xi32>
    %63 = vector.shape_cast %12 : vector<1x128xi1> to vector<1x128xi1>
    %64 = vector.broadcast %63 : vector<1x128xi1> to vector<4x128xi1>
    %65 = vector.shape_cast %62 : vector<4x1xi32> to vector<4x1xi32>
    %66 = vector.broadcast %65 : vector<4x1xi32> to vector<4x128xi32>
    %67 = arith.select %64, %66, %61 : vector<4x128xi1>, vector<4x128xi32>
    %68 = vector.broadcast %19 : vector<1x128xi32> to vector<4x128xi32>
    %69 = arith.cmpi eq, %67, %68 : vector<4x128xi32>
    %70 = arith.extui %69 : vector<4x128xi1> to vector<4x128xi32>
    %71 = arith.sitofp %70 : vector<4x128xi32> to vector<4x128xf32>
    %72 = arith.truncf %71 : vector<4x128xf32> to vector<4x128xbf16>
    %c0_6 = arith.constant 0 : index
    %c128 = arith.constant 128 : index
    %73 = vector.load %arg5[%c0_6, %c128] : memref<4x512xbf16, #tpu.memory_space<vmem>>, vector<4x128xbf16>
    tpu.vector_store %arg5[%c0_6, %c128], %72 {strides = array<i32>} : memref<4x512xbf16, #tpu.memory_space<vmem>>, vector<4x128xbf16>,
    %74 = vector.extract_strided_slice %0 {offsets = [0, 10], sizes = [4, 1], strides = [1, 1]} : vector<4x20xi32> to vector<4x1xi32>
    %75 = vector.extract_strided_slice %0 {offsets = [0, 11], sizes = [4, 1], strides = [1, 1]} : vector<4x20xi32> to vector<4x1xi32>
    %76 = vector.shape_cast %4 : vector<1x128xi1> to vector<1x128xi1>
    %77 = vector.broadcast %76 : vector<1x128xi1> to vector<4x128xi1>
    %78 = vector.shape_cast %75 : vector<4x1xi32> to vector<4x1xi32>
    %79 = vector.broadcast %78 : vector<4x1xi32> to vector<4x128xi32>
    %80 = vector.shape_cast %74 : vector<4x1xi32> to vector<4x1xi32>
    %81 = vector.broadcast %80 : vector<4x1xi32> to vector<4x128xi32>
    %82 = arith.select %77, %79, %81 : vector<4x128xi1>, vector<4x128xi32>
    %83 = vector.extract_strided_slice %0 {offsets = [0, 12], sizes = [4, 1], strides = [1, 1]} : vector<4x20xi32> to vector<4x1xi32>
    %84 = vector.shape_cast %8 : vector<1x128xi1> to vector<1x128xi1>
    %85 = vector.broadcast %84 : vector<1x128xi1> to vector<4x128xi1>
    %86 = vector.shape_cast %83 : vector<4x1xi32> to vector<4x1xi32>
    %87 = vector.broadcast %86 : vector<4x1xi32> to vector<4x128xi32>
    %88 = arith.select %85, %87, %82 : vector<4x128xi1>, vector<4x128xi32>
    %89 = vector.extract_strided_slice %0 {offsets = [0, 13], sizes = [4, 1], strides = [1, 1]} : vector<4x20xi32> to vector<4x1xi32>
    %90 = vector.shape_cast %12 : vector<1x128xi1> to vector<1x128xi1>
    %91 = vector.broadcast %90 : vector<1x128xi1> to vector<4x128xi1>
    %92 = vector.shape_cast %89 : vector<4x1xi32> to vector<4x1xi32>
    %93 = vector.broadcast %92 : vector<4x1xi32> to vector<4x128xi32>
    %94 = arith.select %91, %93, %88 : vector<4x128xi1>, vector<4x128xi32>
    %95 = vector.broadcast %19 : vector<1x128xi32> to vector<4x128xi32>
    %96 = arith.cmpi eq, %94, %95 : vector<4x128xi32>
    %97 = arith.extui %96 : vector<4x128xi1> to vector<4x128xi32>
    %98 = arith.sitofp %97 : vector<4x128xi32> to vector<4x128xf32>
    %99 = arith.truncf %98 : vector<4x128xf32> to vector<4x128xbf16>
    %c0_7 = arith.constant 0 : index
    %c256 = arith.constant 256 : index
    %100 = vector.load %arg5[%c0_7, %c256] : memref<4x512xbf16, #tpu.memory_space<vmem>>, vector<4x128xbf16>
    tpu.vector_store %arg5[%c0_7, %c256], %99 {strides = array<i32>} : memref<4x512xbf16, #tpu.memory_space<vmem>>, vector<4x128xbf16>,
    %101 = vector.extract_strided_slice %0 {offsets = [0, 15], sizes = [4, 1], strides = [1, 1]} : vector<4x20xi32> to vector<4x1xi32>
    %102 = vector.extract_strided_slice %0 {offsets = [0, 16], sizes = [4, 1], strides = [1, 1]} : vector<4x20xi32> to vector<4x1xi32>
    %103 = vector.shape_cast %4 : vector<1x128xi1> to vector<1x128xi1>
    %104 = vector.broadcast %103 : vector<1x128xi1> to vector<4x128xi1>
    %105 = vector.shape_cast %102 : vector<4x1xi32> to vector<4x1xi32>
    %106 = vector.broadcast %105 : vector<4x1xi32> to vector<4x128xi32>
    %107 = vector.shape_cast %101 : vector<4x1xi32> to vector<4x1xi32>
    %108 = vector.broadcast %107 : vector<4x1xi32> to vector<4x128xi32>
    %109 = arith.select %104, %106, %108 : vector<4x128xi1>, vector<4x128xi32>
    %110 = vector.extract_strided_slice %0 {offsets = [0, 17], sizes = [4, 1], strides = [1, 1]} : vector<4x20xi32> to vector<4x1xi32>
    %111 = vector.shape_cast %8 : vector<1x128xi1> to vector<1x128xi1>
    %112 = vector.broadcast %111 : vector<1x128xi1> to vector<4x128xi1>
    %113 = vector.shape_cast %110 : vector<4x1xi32> to vector<4x1xi32>
    %114 = vector.broadcast %113 : vector<4x1xi32> to vector<4x128xi32>
    %115 = arith.select %112, %114, %109 : vector<4x128xi1>, vector<4x128xi32>
    %116 = vector.extract_strided_slice %0 {offsets = [0, 18], sizes = [4, 1], strides = [1, 1]} : vector<4x20xi32> to vector<4x1xi32>
    %117 = vector.shape_cast %12 : vector<1x128xi1> to vector<1x128xi1>
    %118 = vector.broadcast %117 : vector<1x128xi1> to vector<4x128xi1>
    %119 = vector.shape_cast %116 : vector<4x1xi32> to vector<4x1xi32>
    %120 = vector.broadcast %119 : vector<4x1xi32> to vector<4x128xi32>
    %121 = arith.select %118, %120, %115 : vector<4x128xi1>, vector<4x128xi32>
    %122 = vector.broadcast %19 : vector<1x128xi32> to vector<4x128xi32>
    %123 = arith.cmpi eq, %121, %122 : vector<4x128xi32>
    %124 = arith.extui %123 : vector<4x128xi1> to vector<4x128xi32>
    %125 = arith.sitofp %124 : vector<4x128xi32> to vector<4x128xf32>
    %126 = arith.truncf %125 : vector<4x128xf32> to vector<4x128xbf16>
    %c0_8 = arith.constant 0 : index
    %c384 = arith.constant 384 : index
    %127 = vector.load %arg5[%c0_8, %c384] : memref<4x512xbf16, #tpu.memory_space<vmem>>, vector<4x128xbf16>
    tpu.vector_store %arg5[%c0_8, %c384], %126 {strides = array<i32>} : memref<4x512xbf16, #tpu.memory_space<vmem>>, vector<4x128xbf16>,
    %c0_9 = arith.constant 0 : index
    %c0_10 = arith.constant 0 : index
    %128 = vector.load %arg5[%c0_9, %c0_10] : memref<4x512xbf16, #tpu.memory_space<vmem>>, vector<4x512xbf16>
    %c0_11 = arith.constant 0 : index
    %c0_12 = arith.constant 0 : index
    %129 = vector.load %arg2[%c0_11, %c0_12] : memref<512x128xbf16, #tpu.memory_space<vmem>>, vector<512x128xbf16>
    %cst = arith.constant dense<0.000000e+00> : vector<4x128xf32>
    %130 = tpu.matmul %128, %129, %cst {dimension_numbers = #tpu.dot_dimension_numbers<[1], [0], [0], [1], [0, 0, 1, 1], [], []>} : vector<4x512xbf16>, vector<512x128xbf16>, vector<4x128xf32> -> vector<4x128xf32>
    %c0_13 = arith.constant 0 : index
    %c0_14 = arith.constant 0 : index
    %131 = vector.load %arg3[%c0_13, %c0_14] : memref<512x128xbf16, #tpu.memory_space<vmem>>, vector<512x128xbf16>
    %cst_15 = arith.constant dense<0.000000e+00> : vector<4x128xf32>
    %132 = tpu.matmul %128, %131, %cst_15 {dimension_numbers = #tpu.dot_dimension_numbers<[1], [0], [0], [1], [0, 0, 1, 1], [], []>} : vector<4x512xbf16>, vector<512x128xbf16>, vector<4x128xf32> -> vector<4x128xf32>
    %133 = arith.addf %130, %132 : vector<4x128xf32>
    %c0_16 = arith.constant 0 : index
    %c0_17 = arith.constant 0 : index
    %134 = vector.load %arg4[%c0_16, %c0_17] : memref<4x128xf32, #tpu.memory_space<vmem>>, vector<4x128xf32>
    tpu.vector_store %arg4[%c0_16, %c0_17], %133 {strides = array<i32>} : memref<4x128xf32, #tpu.memory_space<vmem>>, vector<4x128xf32>,
    return
  }
  func.func @transform_0(%arg0: i32) -> (i32, i32) {
    %c0_i32 = arith.constant 0 : i32
    %c0_i32_0 = arith.constant 0 : i32
    return %arg0, %c0_i32 : i32, i32
  }
  func.func @transform_1(%arg0: i32) -> (i32, i32) {
    %c0_i32 = arith.constant 0 : i32
    %c0_i32_0 = arith.constant 0 : i32
    %c0_i32_1 = arith.constant 0 : i32
    return %c0_i32, %c0_i32_0 : i32, i32
  }
  func.func @transform_2(%arg0: i32) -> (i32, i32) {
    %c0_i32 = arith.constant 0 : i32
    %c0_i32_0 = arith.constant 0 : i32
    %c0_i32_1 = arith.constant 0 : i32
    return %c0_i32, %c0_i32_0 : i32, i32
  }
  func.func @transform_3(%arg0: i32) -> (i32, i32) {
    %c0_i32 = arith.constant 0 : i32
    %c0_i32_0 = arith.constant 0 : i32
    return %arg0, %c0_i32 : i32, i32
  }
}

</mosaic_0001>

<llo_original>
// kernel: temporal_embedding.1
$region0: #{temporal_embedding.1}
  #allocation0 [shape = 'u32[]', space=smem, size = 0x4, offset = 0x4, fixed_abs, tag = 'smem constant byte address 0x4 - core index']
  #allocation1 [shape = 'u32[72,128]{1,0:T(1,128)}', space=vmem, size = 0x9000, scoped, tag = 'internal scratch']
  #allocation2 [shape = 'bf16[4,512]{1,0:T(4,128)(2,1)}', space=vmem, size = 0x1000, scoped, tag = 'scratch operand']
  %s0 = inlined_call_operand.vmem [shape: s32[4,20], index: 0, kind: input, shape index: {}]
  %s1 = inlined_call_operand.vmem [shape: bf16[512,128], index: 1, kind: input, shape index: {}]
  %s2 = inlined_call_operand.vmem [shape: bf16[512,128], index: 2, kind: input, shape index: {}]
  %s3 = inlined_call_operand.vmem [shape: f32[4,128], index: 3, kind: output, shape index: {}]
  %s4 = sld [smem:[#allocation0]]
  $region22: #{temporal_embedding.1} parent=0
    _
  %s6 = ssub.s32 1, %s4
  %s7 = scalar_select 0, %s6, %s4
  // Predicated region
  $region2: #{temporal_embedding.1} parent=0 // pred_check
    _
  $region3: #{temporal_embedding.1} parent=0 // pred_check_branch
    %9 = sbr.rel (0) target = $region5
  $region4: #{temporal_embedding.1} parent=0 // pred_region
    _
  $region5: #{temporal_embedding.1} parent=0 // pred_fallthru
    _
  // Predicated region
  $region6: #{temporal_embedding.1} parent=0 // pred_check
    _
  $region7: #{temporal_embedding.1} parent=0 // pred_check_branch
    %11 = sbr.rel (0) target = $region9
  $region8: #{temporal_embedding.1} parent=0 // pred_region
    _
  $region9: #{temporal_embedding.1} parent=0 // pred_fallthru
    _
  // Predicated region
  $region10: #{temporal_embedding.1} parent=0 // pred_check
    _
  $region11: #{temporal_embedding.1} parent=0 // pred_check_branch
    %13 = sbr.rel (0) target = $region13
  $region12: #{temporal_embedding.1} parent=0 // pred_region
    _
  $region13: #{temporal_embedding.1} parent=0 // pred_fallthru
    _
  %v14 = vld [vmem:[%s0] sm:$0xf]
  %v15 = vlaneseq
  %v16 = vand.u32 %v15, 127
  %vm17 = vcmp.ge.s32.totalorder %v16, 13
  %v18 = vsel %vm17, 13, 0
  %vm19 = vcmp.ge.s32.totalorder %v16, 45
  %v20 = vsel %vm19, 45, %v18
  %vm21 = vcmp.ge.s32.totalorder %v16, 52
  %v22 = vsel %vm21, 52, %v20
  %vm23 = vcmp.lt.s32.totalorder %v16, 76
  %v24 = vsub.s32 %v16, %v22
  %v25 = vsel %vm23, %v24, 4294967295
  %v26 = vsel %vm17, 1, 0
  %vm27 = vcmp.eq.s32.totalorder %v26, 1
  %28 = vset.pattern.permute.xlu0 1
  %29 = vperm.xlu0 %28, %v14
  %v30 = vpop.permute.xlu0 %29
  %31 = vset.pattern.permute.xlu0 0
  %32 = vperm.xlu0 %31, %v14
  %v33 = vpop.permute.xlu0 %32
  %v34 = vsel %vm27, %v30, %v33
  %v35 = vsel %vm19, 1, 0
  %vm36 = vcmp.eq.s32.totalorder %v35, 1
  %37 = vset.pattern.permute.xlu0 2
  %38 = vperm.xlu0 %37, %v14
  %v39 = vpop.permute.xlu0 %38
  %v40 = vsel %vm36, %v39, %v34
  %v41 = vsel %vm21, 1, 0
  %vm42 = vcmp.eq.s32.totalorder %v41, 1
  %43 = vset.pattern.permute.xlu0 3
  %44 = vperm.xlu0 %43, %v14
  %v45 = vpop.permute.xlu0 %44
  %v46 = vsel %vm42, %v45, %v40
  %vm47 = vcmp.eq.s32.totalorder %v46, %v25
  %v48 = vsel %vm47, 1, 0
  %v49 = vcvt.s32.f32 %v48
  %v50 = vpack.c.bf16 %v49, %v49
  %51 = vst [vmem:[#allocation2] sm:$0x3] %v50
  %52 = vset.pattern.permute.xlu0 6
  %53 = vperm.xlu0 %52, %v14
  %v54 = vpop.permute.xlu0 %53
  %55 = vset.pattern.permute.xlu0 5
  %56 = vperm.xlu0 %55, %v14
  %v57 = vpop.permute.xlu0 %56
  %v58 = vsel %vm27, %v54, %v57
  %59 = vset.pattern.permute.xlu0 7
  %60 = vperm.xlu0 %59, %v14
  %v61 = vpop.permute.xlu0 %60
  %v62 = vsel %vm36, %v61, %v58
  %63 = vset.pattern.permute.xlu0 8
  %64 = vperm.xlu0 %63, %v14
  %v65 = vpop.permute.xlu0 %64
  %v66 = vsel %vm42, %v65, %v62
  %vm67 = vcmp.eq.s32.totalorder %v66, %v25
  %v68 = vsel %vm67, 1, 0
  %v69 = vcvt.s32.f32 %v68
  %v70 = vpack.c.bf16 %v69, %v69
  %71 = vst [vmem:[#allocation2 + $0x2] sm:$0x3] %v70
  %72 = vset.pattern.permute.xlu0 11
  %73 = vperm.xlu0 %72, %v14
  %v74 = vpop.permute.xlu0 %73
  %75 = vset.pattern.permute.xlu0 10
  %76 = vperm.xlu0 %75, %v14
  %v77 = vpop.permute.xlu0 %76
  %v78 = vsel %vm27, %v74, %v77
  %79 = vset.pattern.permute.xlu0 12
  %80 = vperm.xlu0 %79, %v14
  %v81 = vpop.permute.xlu0 %80
  %v82 = vsel %vm36, %v81, %v78
  %83 = vset.pattern.permute.xlu0 13
  %84 = vperm.xlu0 %83, %v14
  %v85 = vpop.permute.xlu0 %84
  %v86 = vsel %vm42, %v85, %v82
  %vm87 = vcmp.eq.s32.totalorder %v86, %v25
  %v88 = vsel %vm87, 1, 0
  %v89 = vcvt.s32.f32 %v88
  %v90 = vpack.c.bf16 %v89, %v89
  %91 = vst [vmem:[#allocation2 + $0x4] sm:$0x3] %v90
  %92 = vset.pattern.permute.xlu0 16
  %93 = vperm.xlu0 %92, %v14
  %v94 = vpop.permute.xlu0 %93
  %95 = vset.pattern.permute.xlu0 15
  %96 = vperm.xlu0 %95, %v14
  %v97 = vpop.permute.xlu0 %96
  %v98 = vsel %vm27, %v94, %v97
  %99 = vset.pattern.permute.xlu0 17
  %100 = vperm.xlu0 %99, %v14
  %v101 = vpop.permute.xlu0 %100
  %v102 = vsel %vm36, %v101, %v98
  %103 = vset.pattern.permute.xlu0 18
  %104 = vperm.xlu0 %103, %v14
  %v105 = vpop.permute.xlu0 %104
  %v106 = vsel %vm42, %v105, %v102
  %vm107 = vcmp.eq.s32.totalorder %v106, %v25
  %v108 = vsel %vm107, 1, 0
  %v109 = vcvt.s32.f32 %v108
  %v110 = vpack.c.bf16 %v109, %v109
  %111 = vst [vmem:[#allocation2 + $0x6] sm:$0x3] %v110
  %v112 = vld [vmem:[#allocation2] sm:$0xff]
  %v113 = vld [vmem:[%s1] sm:$0xf]
  %v114 = vld [vmem:[%s1 + $0x4] sm:$0xf]
  %v115 = vld [vmem:[%s1 + $0x8] sm:$0xf]
  %v116 = vld [vmem:[%s1 + $0xc] sm:$0xf]
  %v117 = vld [vmem:[%s1 + $0x10] sm:$0xf]
  %v118 = vld [vmem:[%s1 + $0x14] sm:$0xf]
  %v119 = vld [vmem:[%s1 + $0x18] sm:$0xf]
  %v120 = vld [vmem:[%s1 + $0x1c] sm:$0xf]
  %v121 = vld [vmem:[%s1 + $0x20] sm:$0xf]
  %v122 = vld [vmem:[%s1 + $0x24] sm:$0xf]
  %v123 = vld [vmem:[%s1 + $0x28] sm:$0xf]
  %v124 = vld [vmem:[%s1 + $0x2c] sm:$0xf]
  %v125 = vld [vmem:[%s1 + $0x30] sm:$0xf]
  %v126 = vld [vmem:[%s1 + $0x34] sm:$0xf]
  %v127 = vld [vmem:[%s1 + $0x38] sm:$0xf]
  %v128 = vld [vmem:[%s1 + $0x3c] sm:$0xf]
  %v129 = vld [vmem:[%s1 + $0x40] sm:$0xf]
  %v130 = vld [vmem:[%s1 + $0x44] sm:$0xf]
  %v131 = vld [vmem:[%s1 + $0x48] sm:$0xf]
  %v132 = vld [vmem:[%s1 + $0x4c] sm:$0xf]
  %v133 = vld [vmem:[%s1 + $0x50] sm:$0xf]
  %v134 = vld [vmem:[%s1 + $0x54] sm:$0xf]
  %v135 = vld [vmem:[%s1 + $0x58] sm:$0xf]
  %v136 = vld [vmem:[%s1 + $0x5c] sm:$0xf]
  %v137 = vld [vmem:[%s1 + $0x60] sm:$0xf]
  %v138 = vld [vmem:[%s1 + $0x64] sm:$0xf]
  %v139 = vld [vmem:[%s1 + $0x68] sm:$0xf]
  %v140 = vld [vmem:[%s1 + $0x6c] sm:$0xf]
  %v141 = vld [vmem:[%s1 + $0x70] sm:$0xf]
  %v142 = vld [vmem:[%s1 + $0x74] sm:$0xf]
  %v143 = vld [vmem:[%s1 + $0x78] sm:$0xf]
  %v144 = vld [vmem:[%s1 + $0x7c] sm:$0xf]
  %v145 = vld [vmem:[%s1 + $0x80] sm:$0xf]
  %v146 = vld [vmem:[%s1 + $0x84] sm:$0xf]
  %v147 = vld [vmem:[%s1 + $0x88] sm:$0xf]
  %v148 = vld [vmem:[%s1 + $0x8c] sm:$0xf]
  %v149 = vld [vmem:[%s1 + $0x90] sm:$0xf]
  %v150 = vld [vmem:[%s1 + $0x94] sm:$0xf]
  %v151 = vld [vmem:[%s1 + $0x98] sm:$0xf]
  %v152 = vld [vmem:[%s1 + $0x9c] sm:$0xf]
  %v153 = vld [vmem:[%s1 + $0xa0] sm:$0xf]
  %v154 = vld [vmem:[%s1 + $0xa4] sm:$0xf]
  %v155 = vld [vmem:[%s1 + $0xa8] sm:$0xf]
  %v156 = vld [vmem:[%s1 + $0xac] sm:$0xf]
  %v157 = vld [vmem:[%s1 + $0xb0] sm:$0xf]
  %v158 = vld [vmem:[%s1 + $0xb4] sm:$0xf]
  %v159 = vld [vmem:[%s1 + $0xb8] sm:$0xf]
  %v160 = vld [vmem:[%s1 + $0xbc] sm:$0xf]
  %v161 = vld [vmem:[%s1 + $0xc0] sm:$0xf]
  %v162 = vld [vmem:[%s1 + $0xc4] sm:$0xf]
  %v163 = vld [vmem:[%s1 + $0xc8] sm:$0xf]
  %v164 = vld [vmem:[%s1 + $0xcc] sm:$0xf]
  %v165 = vld [vmem:[%s1 + $0xd0] sm:$0xf]
  %v166 = vld [vmem:[%s1 + $0xd4] sm:$0xf]
  %v167 = vld [vmem:[%s1 + $0xd8] sm:$0xf]
  %v168 = vld [vmem:[%s1 + $0xdc] sm:$0xf]
  %v169 = vld [vmem:[%s1 + $0xe0] sm:$0xf]
  %v170 = vld [vmem:[%s1 + $0xe4] sm:$0xf]
  %v171 = vld [vmem:[%s1 + $0xe8] sm:$0xf]
  %v172 = vld [vmem:[%s1 + $0xec] sm:$0xf]
  %v173 = vld [vmem:[%s1 + $0xf0] sm:$0xf]
  %v174 = vld [vmem:[%s1 + $0xf4] sm:$0xf]
  %v175 = vld [vmem:[%s1 + $0xf8] sm:$0xf]
  %v176 = vld [vmem:[%s1 + $0xfc] sm:$0xf]
  %v177 = vld [vmem:[%s2] sm:$0xf]
  %v178 = vld [vmem:[%s2 + $0x4] sm:$0xf]
  %v179 = vld [vmem:[%s2 + $0x8] sm:$0xf]
  %v180 = vld [vmem:[%s2 + $0xc] sm:$0xf]
  %v181 = vld [vmem:[%s2 + $0x10] sm:$0xf]
  %v182 = vld [vmem:[%s2 + $0x14] sm:$0xf]
  %v183 = vld [vmem:[%s2 + $0x18] sm:$0xf]
  %v184 = vld [vmem:[%s2 + $0x1c] sm:$0xf]
  %v185 = vld [vmem:[%s2 + $0x20] sm:$0xf]
  %v186 = vld [vmem:[%s2 + $0x24] sm:$0xf]
  %v187 = vld [vmem:[%s2 + $0x28] sm:$0xf]
  %v188 = vld [vmem:[%s2 + $0x2c] sm:$0xf]
  %v189 = vld [vmem:[%s2 + $0x30] sm:$0xf]
  %v190 = vld [vmem:[%s2 + $0x34] sm:$0xf]
  %v191 = vld [vmem:[%s2 + $0x38] sm:$0xf]
  %v192 = vld [vmem:[%s2 + $0x3c] sm:$0xf]
  %v193 = vld [vmem:[%s2 + $0x40] sm:$0xf]
  %v194 = vld [vmem:[%s2 + $0x44] sm:$0xf]
  %v195 = vld [vmem:[%s2 + $0x48] sm:$0xf]
  %v196 = vld [vmem:[%s2 + $0x4c] sm:$0xf]
  %v197 = vld [vmem:[%s2 + $0x50] sm:$0xf]
  %v198 = vld [vmem:[%s2 + $0x54] sm:$0xf]
  %v199 = vld [vmem:[%s2 + $0x58] sm:$0xf]
  %v200 = vld [vmem:[%s2 + $0x5c] sm:$0xf]
  %v201 = vld [vmem:[%s2 + $0x60] sm:$0xf]
  %v202 = vld [vmem:[%s2 + $0x64] sm:$0xf]
  %v203 = vld [vmem:[%s2 + $0x68] sm:$0xf]
  %v204 = vld [vmem:[%s2 + $0x6c] sm:$0xf]
  %v205 = vld [vmem:[%s2 + $0x70] sm:$0xf]
  %v206 = vld [vmem:[%s2 + $0x74] sm:$0xf]
  %v207 = vld [vmem:[%s2 + $0x78] sm:$0xf]
  %v208 = vld [vmem:[%s2 + $0x7c] sm:$0xf]
  %v209 = vld [vmem:[%s2 + $0x80] sm:$0xf]
  %v210 = vld [vmem:[%s2 + $0x84] sm:$0xf]
  %v211 = vld [vmem:[%s2 + $0x88] sm:$0xf]
  %v212 = vld [vmem:[%s2 + $0x8c] sm:$0xf]
  %v213 = vld [vmem:[%s2 + $0x90] sm:$0xf]
  %v214 = vld [vmem:[%s2 + $0x94] sm:$0xf]
  %v215 = vld [vmem:[%s2 + $0x98] sm:$0xf]
  %v216 = vld [vmem:[%s2 + $0x9c] sm:$0xf]
  %v217 = vld [vmem:[%s2 + $0xa0] sm:$0xf]
  %v218 = vld [vmem:[%s2 + $0xa4] sm:$0xf]
  %v219 = vld [vmem:[%s2 + $0xa8] sm:$0xf]
  %v220 = vld [vmem:[%s2 + $0xac] sm:$0xf]
  %v221 = vld [vmem:[%s2 + $0xb0] sm:$0xf]
  %v222 = vld [vmem:[%s2 + $0xb4] sm:$0xf]
  %v223 = vld [vmem:[%s2 + $0xb8] sm:$0xf]
  %v224 = vld [vmem:[%s2 + $0xbc] sm:$0xf]
  %v225 = vld [vmem:[%s2 + $0xc0] sm:$0xf]
  %v226 = vld [vmem:[%s2 + $0xc4] sm:$0xf]
  %v227 = vld [vmem:[%s2 + $0xc8] sm:$0xf]
  %v228 = vld [vmem:[%s2 + $0xcc] sm:$0xf]
  %v229 = vld [vmem:[%s2 + $0xd0] sm:$0xf]
  %v230 = vld [vmem:[%s2 + $0xd4] sm:$0xf]
  %v231 = vld [vmem:[%s2 + $0xd8] sm:$0xf]
  %v232 = vld [vmem:[%s2 + $0xdc] sm:$0xf]
  %v233 = vld [vmem:[%s2 + $0xe0] sm:$0xf]
  %v234 = vld [vmem:[%s2 + $0xe4] sm:$0xf]
  %v235 = vld [vmem:[%s2 + $0xe8] sm:$0xf]
  %v236 = vld [vmem:[%s2 + $0xec] sm:$0xf]
  %v237 = vld [vmem:[%s2 + $0xf0] sm:$0xf]
  %v238 = vld [vmem:[%s2 + $0xf4] sm:$0xf]
  %v239 = vld [vmem:[%s2 + $0xf8] sm:$0xf]
  %v240 = vld [vmem:[%s2 + $0xfc] sm:$0xf]
  %242 = vst [vmem:[#allocation1] ss:$4 sm:$0xff] %v112
  %v243 = vld.sshfl [vmem:[#allocation1] sm:$0xff pattern:$0x73625140]
  %v244 = vld.sshfl [vmem:[#allocation1 + $0x8] sm:$0xff pattern:$0x73625140]
  %v245 = vld.sshfl [vmem:[#allocation1 + $0x10] sm:$0xff pattern:$0x73625140]
  %v246 = vld.sshfl [vmem:[#allocation1 + $0x18] sm:$0xff pattern:$0x73625140]
  %v315 = vunpack.c.l.b16 %v177
  %v316 = vunpack.c.l.b16 %v178
  %v317 = vunpack.c.l.b16 %v179
  %v318 = vunpack.c.l.b16 %v180
  %v319 = vunpack.c.l.b16 %v181
  %v320 = vunpack.c.l.b16 %v182
  %v321 = vunpack.c.l.b16 %v183
  %v322 = vunpack.c.l.b16 %v184
  %v323 = vunpack.c.l.b16 %v185
  %v324 = vunpack.c.l.b16 %v186
  %v325 = vunpack.c.l.b16 %v187
  %v326 = vunpack.c.l.b16 %v188
  %v327 = vunpack.c.l.b16 %v189
  %v328 = vunpack.c.l.b16 %v190
  %v329 = vunpack.c.l.b16 %v191
  %v330 = vunpack.c.l.b16 %v192
  %v331 = vunpack.c.l.b16 %v193
  %v332 = vunpack.c.l.b16 %v194
  %v333 = vunpack.c.l.b16 %v195
  %v334 = vunpack.c.l.b16 %v196
  %v335 = vunpack.c.l.b16 %v197
  %v336 = vunpack.c.l.b16 %v198
  %v337 = vunpack.c.l.b16 %v199
  %v338 = vunpack.c.l.b16 %v200
  %v339 = vunpack.c.l.b16 %v201
  %v340 = vunpack.c.l.b16 %v202
  %v341 = vunpack.c.l.b16 %v203
  %v342 = vunpack.c.l.b16 %v204
  %v343 = vunpack.c.l.b16 %v205
  %v344 = vunpack.c.l.b16 %v206
  %v345 = vunpack.c.l.b16 %v207
  %v346 = vunpack.c.l.b16 %v208
  %v347 = vunpack.c.l.b16 %v209
  %v348 = vunpack.c.l.b16 %v210
  %v349 = vunpack.c.l.b16 %v211
  %v350 = vunpack.c.l.b16 %v212
  %v351 = vunpack.c.l.b16 %v213
  %v352 = vunpack.c.l.b16 %v214
  %v353 = vunpack.c.l.b16 %v215
  %v354 = vunpack.c.l.b16 %v216
  %v355 = vunpack.c.l.b16 %v217
  %v356 = vunpack.c.l.b16 %v218
  %v357 = vunpack.c.l.b16 %v219
  %v358 = vunpack.c.l.b16 %v220
  %v359 = vunpack.c.l.b16 %v221
  %v360 = vunpack.c.l.b16 %v222
  %v361 = vunpack.c.l.b16 %v223
  %v362 = vunpack.c.l.b16 %v224
  %v363 = vunpack.c.l.b16 %v225
  %v364 = vunpack.c.l.b16 %v226
  %v365 = vunpack.c.l.b16 %v227
  %v366 = vunpack.c.l.b16 %v228
  %v367 = vunpack.c.l.b16 %v229
  %v368 = vunpack.c.l.b16 %v230
  %v369 = vunpack.c.l.b16 %v231
  %v370 = vunpack.c.l.b16 %v232
  %v371 = vunpack.c.l.b16 %v233
  %v372 = vunpack.c.l.b16 %v234
  %v373 = vunpack.c.l.b16 %v235
  %v374 = vunpack.c.l.b16 %v236
  %v375 = vunpack.c.l.b16 %v237
  %v376 = vunpack.c.l.b16 %v238
  %v377 = vunpack.c.l.b16 %v239
  %v378 = vunpack.c.l.b16 %v240
  %v379 = vpack.c.b16 %v316, %v315
  %v380 = vpack.c.b16 %v318, %v317
  %v381 = vpack.c.b16 %v320, %v319
  %v382 = vpack.c.b16 %v322, %v321
  %v383 = vpack.c.b16 %v324, %v323
  %v384 = vpack.c.b16 %v326, %v325
  %v385 = vpack.c.b16 %v328, %v327
  %v386 = vpack.c.b16 %v330, %v329
  %v387 = vpack.c.b16 %v332, %v331
  %v388 = vpack.c.b16 %v334, %v333
  %v389 = vpack.c.b16 %v336, %v335
  %v390 = vpack.c.b16 %v338, %v337
  %v391 = vpack.c.b16 %v340, %v339
  %v392 = vpack.c.b16 %v342, %v341
  %v393 = vpack.c.b16 %v344, %v343
  %v394 = vpack.c.b16 %v346, %v345
  %v395 = vpack.c.b16 %v348, %v347
  %v396 = vpack.c.b16 %v350, %v349
  %v397 = vpack.c.b16 %v352, %v351
  %v398 = vpack.c.b16 %v354, %v353
  %v399 = vpack.c.b16 %v356, %v355
  %v400 = vpack.c.b16 %v358, %v357
  %v401 = vpack.c.b16 %v360, %v359
  %v402 = vpack.c.b16 %v362, %v361
  %v403 = vpack.c.b16 %v364, %v363
  %v404 = vpack.c.b16 %v366, %v365
  %v405 = vpack.c.b16 %v368, %v367
  %v406 = vpack.c.b16 %v370, %v369
  %v407 = vpack.c.b16 %v372, %v371
  %v408 = vpack.c.b16 %v374, %v373
  %v409 = vpack.c.b16 %v376, %v375
  %v410 = vpack.c.b16 %v378, %v377
  %443 = vmatpush.bf16.msra.mxu0 %v386
  %444 = vmatpush.bf16.msra.mxu0 %v385
  %445 = vmatpush.bf16.msra.mxu0 %v384
  %446 = vmatpush.bf16.msra.mxu0 %v383
  %447 = vmatpush.bf16.msra.mxu0 %v382
  %448 = vmatpush.bf16.msra.mxu0 %v381
  %449 = vmatpush.bf16.msra.mxu0 %v380
  %450 = vmatpush.bf16.msra.mxu0 %v379
  %451 = vmatmul.bf16.gmra.mxu0 %v243
  %v452 = vpop.f32.mrf.mxu0
  %v453 = vadd.f32 0.0, %v452
  %v454 = vpop.f32.mrf.mxu0
  %455 = vdwg.mxu0
  %456 = vmatpush.bf16.msra.mxu0 %v394
  %457 = vmatpush.bf16.msra.mxu0 %v393
  %458 = vmatpush.bf16.msra.mxu0 %v392
  %459 = vmatpush.bf16.msra.mxu0 %v391
  %460 = vmatpush.bf16.msra.mxu0 %v390
  %461 = vmatpush.bf16.msra.mxu0 %v389
  %462 = vmatpush.bf16.msra.mxu0 %v388
  %463 = vmatpush.bf16.msra.mxu0 %v387
  %464 = vmatmul.bf16.gmra.mxu0 %v244
  %v465 = vpop.f32.mrf.mxu0
  %v466 = vadd.f32 %v453, %v465
  %v467 = vpop.f32.mrf.mxu0
  %468 = vdwg.mxu0
  %469 = vmatpush.bf16.msra.mxu0 %v402
  %470 = vmatpush.bf16.msra.mxu0 %v401
  %471 = vmatpush.bf16.msra.mxu0 %v400
  %472 = vmatpush.bf16.msra.mxu0 %v399
  %473 = vmatpush.bf16.msra.mxu0 %v398
  %474 = vmatpush.bf16.msra.mxu0 %v397
  %475 = vmatpush.bf16.msra.mxu0 %v396
  %476 = vmatpush.bf16.msra.mxu0 %v395
  %477 = vmatmul.bf16.gmra.mxu0 %v245
  %v478 = vpop.f32.mrf.mxu0
  %v479 = vadd.f32 %v466, %v478
  %v480 = vpop.f32.mrf.mxu0
  %481 = vdwg.mxu0
  %482 = vmatpush.bf16.msra.mxu0 %v410
  %483 = vmatpush.bf16.msra.mxu0 %v409
  %484 = vmatpush.bf16.msra.mxu0 %v408
  %485 = vmatpush.bf16.msra.mxu0 %v407
  %486 = vmatpush.bf16.msra.mxu0 %v406
  %487 = vmatpush.bf16.msra.mxu0 %v405
  %488 = vmatpush.bf16.msra.mxu0 %v404
  %489 = vmatpush.bf16.msra.mxu0 %v403
  %490 = vmatmul.bf16.gmra.mxu0 %v246
  %v491 = vpop.f32.mrf.mxu0
  %v492 = vadd.f32 %v479, %v491
  %v493 = vpop.f32.mrf.mxu0
  %494 = vdwg.mxu0
  %495 = vst [vmem:[#allocation1] ss:$4 sm:$0xff] %v112
  %v496 = vld.sshfl [vmem:[#allocation1] sm:$0xff pattern:$0x73625140]
  %v497 = vld.sshfl [vmem:[#allocation1 + $0x8] sm:$0xff pattern:$0x73625140]
  %v498 = vld.sshfl [vmem:[#allocation1 + $0x10] sm:$0xff pattern:$0x73625140]
  %v499 = vld.sshfl [vmem:[#allocation1 + $0x18] sm:$0xff pattern:$0x73625140]
  %v568 = vunpack.c.l.b16 %v113
  %v569 = vunpack.c.l.b16 %v114
  %v570 = vunpack.c.l.b16 %v115
  %v571 = vunpack.c.l.b16 %v116
  %v572 = vunpack.c.l.b16 %v117
  %v573 = vunpack.c.l.b16 %v118
  %v574 = vunpack.c.l.b16 %v119
  %v575 = vunpack.c.l.b16 %v120
  %v576 = vunpack.c.l.b16 %v121
  %v577 = vunpack.c.l.b16 %v122
  %v578 = vunpack.c.l.b16 %v123
  %v579 = vunpack.c.l.b16 %v124
  %v580 = vunpack.c.l.b16 %v125
  %v581 = vunpack.c.l.b16 %v126
  %v582 = vunpack.c.l.b16 %v127
  %v583 = vunpack.c.l.b16 %v128
  %v584 = vunpack.c.l.b16 %v129
  %v585 = vunpack.c.l.b16 %v130
  %v586 = vunpack.c.l.b16 %v131
  %v587 = vunpack.c.l.b16 %v132
  %v588 = vunpack.c.l.b16 %v133
  %v589 = vunpack.c.l.b16 %v134
  %v590 = vunpack.c.l.b16 %v135
  %v591 = vunpack.c.l.b16 %v136
  %v592 = vunpack.c.l.b16 %v137
  %v593 = vunpack.c.l.b16 %v138
  %v594 = vunpack.c.l.b16 %v139
  %v595 = vunpack.c.l.b16 %v140
  %v596 = vunpack.c.l.b16 %v141
  %v597 = vunpack.c.l.b16 %v142
  %v598 = vunpack.c.l.b16 %v143
  %v599 = vunpack.c.l.b16 %v144
  %v600 = vunpack.c.l.b16 %v145
  %v601 = vunpack.c.l.b16 %v146
  %v602 = vunpack.c.l.b16 %v147
  %v603 = vunpack.c.l.b16 %v148
  %v604 = vunpack.c.l.b16 %v149
  %v605 = vunpack.c.l.b16 %v150
  %v606 = vunpack.c.l.b16 %v151
  %v607 = vunpack.c.l.b16 %v152
  %v608 = vunpack.c.l.b16 %v153
  %v609 = vunpack.c.l.b16 %v154
  %v610 = vunpack.c.l.b16 %v155
  %v611 = vunpack.c.l.b16 %v156
  %v612 = vunpack.c.l.b16 %v157
  %v613 = vunpack.c.l.b16 %v158
  %v614 = vunpack.c.l.b16 %v159
  %v615 = vunpack.c.l.b16 %v160
  %v616 = vunpack.c.l.b16 %v161
  %v617 = vunpack.c.l.b16 %v162
  %v618 = vunpack.c.l.b16 %v163
  %v619 = vunpack.c.l.b16 %v164
  %v620 = vunpack.c.l.b16 %v165
  %v621 = vunpack.c.l.b16 %v166
  %v622 = vunpack.c.l.b16 %v167
  %v623 = vunpack.c.l.b16 %v168
  %v624 = vunpack.c.l.b16 %v169
  %v625 = vunpack.c.l.b16 %v170
  %v626 = vunpack.c.l.b16 %v171
  %v627 = vunpack.c.l.b16 %v172
  %v628 = vunpack.c.l.b16 %v173
  %v629 = vunpack.c.l.b16 %v174
  %v630 = vunpack.c.l.b16 %v175
  %v631 = vunpack.c.l.b16 %v176
  %v632 = vpack.c.b16 %v569, %v568
  %v633 = vpack.c.b16 %v571, %v570
  %v634 = vpack.c.b16 %v573, %v572
  %v635 = vpack.c.b16 %v575, %v574
  %v636 = vpack.c.b16 %v577, %v576
  %v637 = vpack.c.b16 %v579, %v578
  %v638 = vpack.c.b16 %v581, %v580
  %v639 = vpack.c.b16 %v583, %v582
  %v640 = vpack.c.b16 %v585, %v584
  %v641 = vpack.c.b16 %v587, %v586
  %v642 = vpack.c.b16 %v589, %v588
  %v643 = vpack.c.b16 %v591, %v590
  %v644 = vpack.c.b16 %v593, %v592
  %v645 = vpack.c.b16 %v595, %v594
  %v646 = vpack.c.b16 %v597, %v596
  %v647 = vpack.c.b16 %v599, %v598
  %v648 = vpack.c.b16 %v601, %v600
  %v649 = vpack.c.b16 %v603, %v602
  %v650 = vpack.c.b16 %v605, %v604
  %v651 = vpack.c.b16 %v607, %v606
  %v652 = vpack.c.b16 %v609, %v608
  %v653 = vpack.c.b16 %v611, %v610
  %v654 = vpack.c.b16 %v613, %v612
  %v655 = vpack.c.b16 %v615, %v614
  %v656 = vpack.c.b16 %v617, %v616
  %v657 = vpack.c.b16 %v619, %v618
  %v658 = vpack.c.b16 %v621, %v620
  %v659 = vpack.c.b16 %v623, %v622
  %v660 = vpack.c.b16 %v625, %v624
  %v661 = vpack.c.b16 %v627, %v626
  %v662 = vpack.c.b16 %v629, %v628
  %v663 = vpack.c.b16 %v631, %v630
  %696 = vmatpush.bf16.msra.mxu0 %v639
  %697 = vmatpush.bf16.msra.mxu0 %v638
  %698 = vmatpush.bf16.msra.mxu0 %v637
  %699 = vmatpush.bf16.msra.mxu0 %v636
  %700 = vmatpush.bf16.msra.mxu0 %v635
  %701 = vmatpush.bf16.msra.mxu0 %v634
  %702 = vmatpush.bf16.msra.mxu0 %v633
  %703 = vmatpush.bf16.msra.mxu0 %v632
  %704 = vmatmul.bf16.gmra.mxu0 %v496
  %v705 = vpop.f32.mrf.mxu0
  %v706 = vadd.f32 %v492, %v705
  %v707 = vpop.f32.mrf.mxu0
  %708 = vdwg.mxu0
  %709 = vmatpush.bf16.msra.mxu0 %v647
  %710 = vmatpush.bf16.msra.mxu0 %v646
  %711 = vmatpush.bf16.msra.mxu0 %v645
  %712 = vmatpush.bf16.msra.mxu0 %v644
  %713 = vmatpush.bf16.msra.mxu0 %v643
  %714 = vmatpush.bf16.msra.mxu0 %v642
  %715 = vmatpush.bf16.msra.mxu0 %v641
  %716 = vmatpush.bf16.msra.mxu0 %v640
  %717 = vmatmul.bf16.gmra.mxu0 %v497
  %v718 = vpop.f32.mrf.mxu0
  %v719 = vadd.f32 %v706, %v718
  %v720 = vpop.f32.mrf.mxu0
  %721 = vdwg.mxu0
  %722 = vmatpush.bf16.msra.mxu0 %v655
  %723 = vmatpush.bf16.msra.mxu0 %v654
  %724 = vmatpush.bf16.msra.mxu0 %v653
  %725 = vmatpush.bf16.msra.mxu0 %v652
  %726 = vmatpush.bf16.msra.mxu0 %v651
  %727 = vmatpush.bf16.msra.mxu0 %v650
  %728 = vmatpush.bf16.msra.mxu0 %v649
  %729 = vmatpush.bf16.msra.mxu0 %v648
  %730 = vmatmul.bf16.gmra.mxu0 %v498
  %v731 = vpop.f32.mrf.mxu0
  %v732 = vadd.f32 %v719, %v731
  %v733 = vpop.f32.mrf.mxu0
  %734 = vdwg.mxu0
  %735 = vmatpush.bf16.msra.mxu0 %v663
  %736 = vmatpush.bf16.msra.mxu0 %v662
  %737 = vmatpush.bf16.msra.mxu0 %v661
  %738 = vmatpush.bf16.msra.mxu0 %v660
  %739 = vmatpush.bf16.msra.mxu0 %v659
  %740 = vmatpush.bf16.msra.mxu0 %v658
  %741 = vmatpush.bf16.msra.mxu0 %v657
  %742 = vmatpush.bf16.msra.mxu0 %v656
  %743 = vmatmul.bf16.gmra.mxu0 %v499
  %v744 = vpop.f32.mrf.mxu0
  %v745 = vadd.f32 %v732, %v744
  %v746 = vpop.f32.mrf.mxu0
  %747 = vdwg.mxu0
  %748 = vst [vmem:[%s3] sm:$0xf] %v745
  // Predicated region
  $region14: #{temporal_embedding.1} parent=0 // pred_check
    _
  $region15: #{temporal_embedding.1} parent=0 // pred_check_branch
    %750 = sbr.rel (0) target = $region17
  $region16: #{temporal_embedding.1} parent=0 // pred_region
    _
  $region17: #{temporal_embedding.1} parent=0 // pred_fallthru
    _
  // Predicated region
  $region18: #{temporal_embedding.1} parent=0 // pred_check
    _
  $region19: #{temporal_embedding.1} parent=0 // pred_check_branch
    %752 = sbr.rel (0) target = $region21
  $region20: #{temporal_embedding.1} parent=0 // pred_region
    _
  $region21: #{temporal_embedding.1} parent=0 // pred_fallthru
    _

</llo_original>
